<compile_context>
chip_gen: v7x
topology: tpu7x:2x2x1
jax: 0.10.0
libtpu: 0.0.40
codegen_flags: <defaults>
</compile_context>

<pallas_src>
import functools

import jax
import jax.numpy as jnp
from jax.experimental import pallas as pl
from jax.experimental.pallas import tpu as pltpu


def _round_up(x: int, m: int) -> int:
    return ((x + m - 1) // m) * m


def _baseline_mlp_kernel(x_ref, w1_ref, b1_ref, w2_ref, b2_ref, o_ref):
    # Layer 1: (TB, inp_p) @ (inp_p, 128) -> f32 accum, bias add + tanh in f32.
    h = jnp.dot(x_ref[...], w1_ref[...], preferred_element_type=jnp.float32)
    h = jnp.tanh(h + b1_ref[...])
    # Layer 2: cast hidden back to the storage dtype for the MXU, accumulate f32.
    y = jnp.dot(h.astype(w2_ref.dtype), w2_ref[...],
                preferred_element_type=jnp.float32)
    y = jnp.tanh(y + b2_ref[...])
    o_ref[...] = y.astype(o_ref.dtype)


@functools.partial(jax.jit, static_argnames=("block_b", "compute_dtype"))
def baseline_model_forward(x, w1, b1, w2, b2, *, block_b: int = 2048,
                           compute_dtype=jnp.bfloat16):
    """Forward pass of BaselineModel.

    x : (B, inp) f32;  w1: (inp, hid);  b1: (1, hid);  w2: (hid, out);  b2: (1, out)
    Returns (B, out) f32.  Weights are stored as (in, out), i.e. y = x @ W + b.
    """
    B, inp = x.shape
    hid = w1.shape[1]
    out = w2.shape[1]

    # Lane/sublane-aligned padded dims.
    inp_p = _round_up(inp, 8)      # 27 -> 32 (sublane dim of w1 / K of matmul 1)
    hid_p = _round_up(hid, 128)    # 81 -> 128 (lane-dense hidden)
    out_p = _round_up(out, 128)    # 2  -> 128 (lane-dense output)

    # Batch tile: multiple of 8 sublanes, capped at block_b, covering B.
    tb = min(_round_up(block_b, 8), _round_up(B, 8))
    Bp = _round_up(B, tb)
    grid = (pl.cdiv(Bp, tb),)

    # Pad + cast operands (zero padding keeps the math exact; padded rows of w1
    # and padded cols/rows of w2 are zero, so padded lanes contribute nothing).
    x_p = jnp.pad(x, ((0, Bp - B), (0, inp_p - inp))).astype(compute_dtype)
    w1_p = jnp.pad(w1, ((0, inp_p - inp), (0, hid_p - hid))).astype(compute_dtype)
    w2_p = jnp.pad(w2, ((0, hid_p - hid), (0, out_p - out))).astype(compute_dtype)
    b1_p = jnp.pad(b1.reshape(1, hid), ((0, 0), (0, hid_p - hid))).astype(jnp.float32)
    b2_p = jnp.pad(b2.reshape(1, out), ((0, 0), (0, out_p - out))).astype(jnp.float32)

    y_p = pl.pallas_call(
        _baseline_mlp_kernel,
        out_shape=jax.ShapeDtypeStruct((Bp, out_p), jnp.float32),
        grid=grid,
        in_specs=[
            pl.BlockSpec((tb, inp_p), lambda i: (i, 0)),     # streamed x tiles
            pl.BlockSpec((inp_p, hid_p), lambda i: (0, 0)),  # VMEM-resident weights
            pl.BlockSpec((1, hid_p), lambda i: (0, 0)),
            pl.BlockSpec((hid_p, out_p), lambda i: (0, 0)),
            pl.BlockSpec((1, out_p), lambda i: (0, 0)),
        ],
        out_specs=pl.BlockSpec((tb, out_p), lambda i: (i, 0)),
        compiler_params=pltpu.CompilerParams(
            dimension_semantics=("parallel",)),
    )(x_p, w1_p, b1_p, w2_p, b2_p)

    # Slice the lane-dense padded output back to the logical shape.
    return y_p[:B, :out]


def init_params(key, inp=27, hid=81, out=2):
    # Deterministic init mimicking nn.Linear's uniform(-1/sqrt(fan_in), 1/sqrt(fan_in)).
    k1, k2, k3, k4 = jax.random.split(key, 4)
    bound1 = 1.0 / jnp.sqrt(inp)
    bound2 = 1.0 / jnp.sqrt(hid)
    w1 = jax.random.uniform(k1, (inp, hid), jnp.float32, -bound1, bound1)
    b1 = jax.random.uniform(k2, (1, hid), jnp.float32, -bound1, bound1)
    w2 = jax.random.uniform(k3, (hid, out), jnp.float32, -bound2, bound2)
    b2 = jax.random.uniform(k4, (1, out), jnp.float32, -bound2, bound2)
    return w1, b1, w2, b2


if __name__ == "__main__":
    key = jax.random.PRNGKey(0)
    kx, kp = jax.random.split(key)

    B, INP, HID, OUT = 33, 27, 81, 2  # small batch; exercises padding + multi-tile grid
    x = jax.random.normal(kx, (B, INP), jnp.float32)
    w1, b1, w2, b2 = init_params(kp, INP, HID, OUT)

    # Small block so the grid has >1 step even at this tiny batch size.
    y = baseline_model_forward(x, w1, b1, w2, b2, block_b=16)
    jax.block_until_ready(y)
    assert y.shape == (B, OUT)

    # Reference 1: same bf16-storage / f32-accumulate math as the kernel.
    xb, w1b, w2b = (a.astype(jnp.bfloat16) for a in (x, w1, w2))
    h_ref = jnp.tanh(jnp.dot(xb, w1b, preferred_element_type=jnp.float32) + b1)
    ref_bf = jnp.tanh(jnp.dot(h_ref.astype(jnp.bfloat16), w2b,
                              preferred_element_type=jnp.float32) + b2)
    assert jnp.allclose(y, ref_bf, atol=1e-4, rtol=1e-4), "mismatch vs bf16 reference"

    # Reference 2: full-f32 PyTorch-equivalent math (loose tol for bf16 storage).
    ref_f32 = jnp.tanh(jnp.tanh(x @ w1 + b1) @ w2 + b2)
    assert jnp.allclose(y, ref_f32, atol=3e-2, rtol=0.0), "mismatch vs f32 reference"

    print("KERNEL_OK")
</pallas_src>

<mosaic_0001>
module attributes {stable_mosaic.version = 11 : i64} {
  func.func @_baseline_mlp_kernel(%arg0: i32, %arg1: memref<16x32xbf16, #tpu.memory_space<vmem>>, %arg2: memref<32x128xbf16, #tpu.memory_space<vmem>>, %arg3: memref<1x128xf32, #tpu.memory_space<vmem>>, %arg4: memref<128x128xbf16, #tpu.memory_space<vmem>>, %arg5: memref<1x128xf32, #tpu.memory_space<vmem>>, %arg6: memref<16x128xf32, #tpu.memory_space<vmem>>) attributes {dimension_semantics = [#tpu.dimension_semantics<parallel>], iteration_bounds = array<i64: 3>, scalar_prefetch = 0 : i64, scratch_operands = 0 : i64, tpu.core_type = #tpu.core_type<tc>, window_params = [{transform_indices = @transform_0, window_bounds = array<i64: 16, 32>}, {pipeline_mode = #tpu.pipeline_mode<synchronous>, transform_indices = @transform_1, window_bounds = array<i64: 32, 128>}, {pipeline_mode = #tpu.pipeline_mode<synchronous>, transform_indices = @transform_2, window_bounds = array<i64: 1, 128>}, {pipeline_mode = #tpu.pipeline_mode<synchronous>, transform_indices = @transform_3, window_bounds = array<i64: 128, 128>}, {pipeline_mode = #tpu.pipeline_mode<synchronous>, transform_indices = @transform_4, window_bounds = array<i64: 1, 128>}, {transform_indices = @transform_5, window_bounds = array<i64: 16, 128>}]} {
    %c0 = arith.constant 0 : index
    %c0_0 = arith.constant 0 : index
    %0 = vector.load %arg1[%c0, %c0_0] : memref<16x32xbf16, #tpu.memory_space<vmem>>, vector<16x32xbf16>
    %c0_1 = arith.constant 0 : index
    %c0_2 = arith.constant 0 : index
    %1 = vector.load %arg2[%c0_1, %c0_2] : memref<32x128xbf16, #tpu.memory_space<vmem>>, vector<32x128xbf16>
    %cst = arith.constant dense<0.000000e+00> : vector<16x128xf32>
    %2 = tpu.matmul %0, %1, %cst {dimension_numbers = #tpu.dot_dimension_numbers<[1], [0], [0], [1], [0, 0, 1, 1], [], []>} : vector<16x32xbf16>, vector<32x128xbf16>, vector<16x128xf32> -> vector<16x128xf32>
    %c0_3 = arith.constant 0 : index
    %c0_4 = arith.constant 0 : index
    %3 = vector.load %arg3[%c0_3, %c0_4] : memref<1x128xf32, #tpu.memory_space<vmem>>, vector<1x128xf32>
    %4 = vector.broadcast %3 : vector<1x128xf32> to vector<16x128xf32>
    %5 = arith.addf %2, %4 : vector<16x128xf32>
    %6 = math.tanh %5 : vector<16x128xf32>
    %7 = arith.truncf %6 : vector<16x128xf32> to vector<16x128xbf16>
    %c0_5 = arith.constant 0 : index
    %c0_6 = arith.constant 0 : index
    %8 = vector.load %arg4[%c0_5, %c0_6] : memref<128x128xbf16, #tpu.memory_space<vmem>>, vector<128x128xbf16>
    %cst_7 = arith.constant dense<0.000000e+00> : vector<16x128xf32>
    %9 = tpu.matmul %7, %8, %cst_7 {dimension_numbers = #tpu.dot_dimension_numbers<[1], [0], [0], [1], [0, 0, 1, 1], [], []>} : vector<16x128xbf16>, vector<128x128xbf16>, vector<16x128xf32> -> vector<16x128xf32>
    %c0_8 = arith.constant 0 : index
    %c0_9 = arith.constant 0 : index
    %10 = vector.load %arg5[%c0_8, %c0_9] : memref<1x128xf32, #tpu.memory_space<vmem>>, vector<1x128xf32>
    %11 = vector.broadcast %10 : vector<1x128xf32> to vector<16x128xf32>
    %12 = arith.addf %9, %11 : vector<16x128xf32>
    %13 = math.tanh %12 : vector<16x128xf32>
    %c0_10 = arith.constant 0 : index
    %c0_11 = arith.constant 0 : index
    %14 = vector.load %arg6[%c0_10, %c0_11] : memref<16x128xf32, #tpu.memory_space<vmem>>, vector<16x128xf32>
    tpu.vector_store %arg6[%c0_10, %c0_11], %13 {strides = array<i32>} : memref<16x128xf32, #tpu.memory_space<vmem>>, vector<16x128xf32>,
    return
  }
  func.func @transform_0(%arg0: i32) -> (i32, i32) {
    %c0_i32 = arith.constant 0 : i32
    %c0_i32_0 = arith.constant 0 : i32
    return %arg0, %c0_i32 : i32, i32
  }
  func.func @transform_1(%arg0: i32) -> (i32, i32) {
    %c0_i32 = arith.constant 0 : i32
    %c0_i32_0 = arith.constant 0 : i32
    %c0_i32_1 = arith.constant 0 : i32
    return %c0_i32, %c0_i32_0 : i32, i32
  }
  func.func @transform_2(%arg0: i32) -> (i32, i32) {
    %c0_i32 = arith.constant 0 : i32
    %c0_i32_0 = arith.constant 0 : i32
    %c0_i32_1 = arith.constant 0 : i32
    return %c0_i32, %c0_i32_0 : i32, i32
  }
  func.func @transform_3(%arg0: i32) -> (i32, i32) {
    %c0_i32 = arith.constant 0 : i32
    %c0_i32_0 = arith.constant 0 : i32
    %c0_i32_1 = arith.constant 0 : i32
    return %c0_i32, %c0_i32_0 : i32, i32
  }
  func.func @transform_4(%arg0: i32) -> (i32, i32) {
    %c0_i32 = arith.constant 0 : i32
    %c0_i32_0 = arith.constant 0 : i32
    %c0_i32_1 = arith.constant 0 : i32
    return %c0_i32, %c0_i32_0 : i32, i32
  }
  func.func @transform_5(%arg0: i32) -> (i32, i32) {
    %c0_i32 = arith.constant 0 : i32
    %c0_i32_0 = arith.constant 0 : i32
    return %arg0, %c0_i32 : i32, i32
  }
}

</mosaic_0001>

<llo_original>
// kernel: baseline_model_forward.1
$region0: #{baseline_model_forward.1}
  #allocation0 [shape = 'u32[]', space=smem, size = 0x4, offset = 0x4, fixed_abs, tag = 'smem constant byte address 0x4 - core index']
  #allocation1 [shape = 'u32[144,128]{1,0:T(1,128)}', space=vmem, size = 0x12000, scoped, tag = 'internal scratch']
  %s0 = inlined_call_operand.vmem [shape: bf16[48,32], index: 0, kind: input, shape index: {}]
  %s1 = inlined_call_operand.vmem [shape: bf16[32,128], index: 1, kind: input, shape index: {}]
  %s2 = inlined_call_operand.vmem [shape: f32[1,128], index: 2, kind: input, shape index: {}]
  %s3 = inlined_call_operand.vmem [shape: bf16[128,128], index: 3, kind: input, shape index: {}]
  %s4 = inlined_call_operand.vmem [shape: f32[1,128], index: 4, kind: input, shape index: {}]
  %s5 = inlined_call_operand.vmem [shape: f32[48,128], index: 5, kind: output, shape index: {}]
  %s6 = sld [smem:[#allocation0]]
  $region53: #{baseline_model_forward.1} parent=0
    _
  %s8 = ssub.s32 1, %s6
  %s9 = scalar_select 0, %s8, %s6
  loop: start=0, step=1, limit=5
  $region2: #{baseline_model_forward.1} parent=0 // loop_pre_header
    _
  $region3: #{baseline_model_forward.1} parent=0 // loop_header
    %s11 = sphi 0, %s15
    %p12 = scmp.ge.s32.totalorder %s11, 5
    %s21 = sphi 0, %s23
    %s24 = sphi 0, %s21
    %s25 = sphi 0, %s24
    %s41 = sphi 0, %s25
    %s45 = sphi 0, %s45
    %s47 = sphi 0, %s45
    %s48 = sphi 0, %s47
    %s62 = sphi 0, %s48
    %s66 = sphi 0, %s66
    %s68 = sphi 0, %s66
    %s69 = sphi 0, %s68
    %s83 = sphi 0, %s69
    %s87 = sphi 0, %s87
    %s89 = sphi 0, %s87
    %s90 = sphi 0, %s89
    %s104 = sphi 0, %s90
    %s108 = sphi 0, %s108
    %s110 = sphi 0, %s108
    %s111 = sphi 0, %s110
    %s125 = sphi 0, %s111
    %s131 = sphi 0, %s133
    %s134 = sphi 0, %s131
    %s135 = sphi 0, %s134
    %s151 = sphi 0, %s135
  $region4: #{baseline_model_forward.1} parent=0 // loop_header_branch
    %14 = sbr.rel (%p12) target = $region8
  $region5: #{baseline_model_forward.1} parent=0 // loop_body
    %s16 = ssub.s32 %s11, 1
    %s17 = ssub.s32 %s11, 2
    %s18 = sadd.s32 %s11, 1
    %s19 = ssub.s32 %s11, %s18
    %p20 = scmp.eq.s32.totalorder %s19, 0
    %s22 = sadd.s32 %s21, 1
    %s23 = scalar_select %p20, %s21, %s22
    %p26 = pneg %p20
    %p27 = scmp.eq.s32.totalorder %s11, 2
    %p28 = por %p26, %p27
    %p29 = scmp.ne.s32.totalorder %s21, %s24
    %p30 = scmp.eq.s32.totalorder %s11, 0
    %p31 = por %p29, %p30
    %p32 = scmp.ne.s32.totalorder %s21, %s24
    %p33 = scmp.eq.s32.totalorder %s16, 2
    %p34 = por %p32, %p33
    %p35 = scmp.ne.s32.totalorder %s24, %s25
    %p36 = scmp.eq.s32.totalorder %s16, 0
    %p37 = por %p35, %p36
    %p38 = scmp.ne.s32.totalorder %s24, %s25
    %p39 = scmp.eq.s32.totalorder %s17, 2
    %p40 = por %p38, %p39
    %p42 = scmp.ne.s32.totalorder %s25, %s41
    %p43 = scmp.eq.s32.totalorder %s17, 0
    %p44 = por %p42, %p43
    %s46 = sadd.s32 %s45, 1
    %p49 = scmp.eq.s32.totalorder %s11, 2
    %p50 = scmp.ne.s32.totalorder %s45, %s47
    %p51 = scmp.eq.s32.totalorder %s11, 0
    %p52 = por %p50, %p51
    %p53 = scmp.ne.s32.totalorder %s45, %s47
    %p54 = scmp.eq.s32.totalorder %s16, 2
    %p55 = por %p53, %p54
    %p56 = scmp.ne.s32.totalorder %s47, %s48
    %p57 = scmp.eq.s32.totalorder %s16, 0
    %p58 = por %p56, %p57
    %p59 = scmp.ne.s32.totalorder %s47, %s48
    %p60 = scmp.eq.s32.totalorder %s17, 2
    %p61 = por %p59, %p60
    %p63 = scmp.ne.s32.totalorder %s48, %s62
    %p64 = scmp.eq.s32.totalorder %s17, 0
    %p65 = por %p63, %p64
    %s67 = sadd.s32 %s66, 1
    %p70 = scmp.eq.s32.totalorder %s11, 2
    %p71 = scmp.ne.s32.totalorder %s66, %s68
    %p72 = scmp.eq.s32.totalorder %s11, 0
    %p73 = por %p71, %p72
    %p74 = scmp.ne.s32.totalorder %s66, %s68
    %p75 = scmp.eq.s32.totalorder %s16, 2
    %p76 = por %p74, %p75
    %p77 = scmp.ne.s32.totalorder %s68, %s69
    %p78 = scmp.eq.s32.totalorder %s16, 0
    %p79 = por %p77, %p78
    %p80 = scmp.ne.s32.totalorder %s68, %s69
    %p81 = scmp.eq.s32.totalorder %s17, 2
    %p82 = por %p80, %p81
    %p84 = scmp.ne.s32.totalorder %s69, %s83
    %p85 = scmp.eq.s32.totalorder %s17, 0
    %p86 = por %p84, %p85
    %s88 = sadd.s32 %s87, 1
    %p91 = scmp.eq.s32.totalorder %s11, 2
    %p92 = scmp.ne.s32.totalorder %s87, %s89
    %p93 = scmp.eq.s32.totalorder %s11, 0
    %p94 = por %p92, %p93
    %p95 = scmp.ne.s32.totalorder %s87, %s89
    %p96 = scmp.eq.s32.totalorder %s16, 2
    %p97 = por %p95, %p96
    %p98 = scmp.ne.s32.totalorder %s89, %s90
    %p99 = scmp.eq.s32.totalorder %s16, 0
    %p100 = por %p98, %p99
    %p101 = scmp.ne.s32.totalorder %s89, %s90
    %p102 = scmp.eq.s32.totalorder %s17, 2
    %p103 = por %p101, %p102
    %p105 = scmp.ne.s32.totalorder %s90, %s104
    %p106 = scmp.eq.s32.totalorder %s17, 0
    %p107 = por %p105, %p106
    %s109 = sadd.s32 %s108, 1
    %p112 = scmp.eq.s32.totalorder %s11, 2
    %p113 = scmp.ne.s32.totalorder %s108, %s110
    %p114 = scmp.eq.s32.totalorder %s11, 0
    %p115 = por %p113, %p114
    %p116 = scmp.ne.s32.totalorder %s108, %s110
    %p117 = scmp.eq.s32.totalorder %s16, 2
    %p118 = por %p116, %p117
    %p119 = scmp.ne.s32.totalorder %s110, %s111
    %p120 = scmp.eq.s32.totalorder %s16, 0
    %p121 = por %p119, %p120
    %p122 = scmp.ne.s32.totalorder %s110, %s111
    %p123 = scmp.eq.s32.totalorder %s17, 2
    %p124 = por %p122, %p123
    %p126 = scmp.ne.s32.totalorder %s111, %s125
    %p127 = scmp.eq.s32.totalorder %s17, 0
    %p128 = por %p126, %p127
    %s129 = ssub.s32 %s11, %s18
    %p130 = scmp.eq.s32.totalorder %s129, 0
    %s132 = sadd.s32 %s131, 1
    %s133 = scalar_select %p130, %s131, %s132
    %p136 = pneg %p130
    %p137 = scmp.eq.s32.totalorder %s11, 2
    %p138 = por %p136, %p137
    %p139 = scmp.ne.s32.totalorder %s131, %s134
    %p140 = scmp.eq.s32.totalorder %s11, 0
    %p141 = por %p139, %p140
    %p142 = scmp.ne.s32.totalorder %s131, %s134
    %p143 = scmp.eq.s32.totalorder %s16, 2
    %p144 = por %p142, %p143
    %p145 = scmp.ne.s32.totalorder %s134, %s135
    %p146 = scmp.eq.s32.totalorder %s16, 0
    %p147 = por %p145, %p146
    %p148 = scmp.ne.s32.totalorder %s134, %s135
    %p149 = scmp.eq.s32.totalorder %s17, 2
    %p150 = por %p148, %p149
    %p152 = scmp.ne.s32.totalorder %s135, %s151
    %p153 = scmp.eq.s32.totalorder %s17, 0
    %p154 = por %p152, %p153
    %p155 = scmp.le.s32.totalorder 1, %s11
    %p156 = scmp.lt.s32.totalorder %s11, 4
    %p157 = pnand %p155, %p156
    %p158 = pneg %p157
    // Predicated region
    $region9: #{baseline_model_forward.1} parent=5 // pred_check
      _
    $region10: #{baseline_model_forward.1} parent=5 // pred_check_branch
      %160 = sbr.rel (%p157) target = $region12
    $region11: #{baseline_model_forward.1} parent=5 // pred_region
      %s161 = ssub.s32 %s11, 1
      // Predicated region
      $region13: #{baseline_model_forward.1} parent=11 // pred_check
        %p162 = pneg %p58
      $region14: #{baseline_model_forward.1} parent=11 // pred_check_branch
        %164 = sbr.rel (%p162) target = $region16
      $region15: #{baseline_model_forward.1} parent=11 // pred_region
        _
      $region16: #{baseline_model_forward.1} parent=11 // pred_fallthru
        _
      // Predicated region
      $region17: #{baseline_model_forward.1} parent=11 // pred_check
        %p165 = pneg %p79
      $region18: #{baseline_model_forward.1} parent=11 // pred_check_branch
        %167 = sbr.rel (%p165) target = $region20
      $region19: #{baseline_model_forward.1} parent=11 // pred_region
        _
      $region20: #{baseline_model_forward.1} parent=11 // pred_fallthru
        _
      // Predicated region
      $region21: #{baseline_model_forward.1} parent=11 // pred_check
        %p168 = pneg %p100
      $region22: #{baseline_model_forward.1} parent=11 // pred_check_branch
        %170 = sbr.rel (%p168) target = $region24
      $region23: #{baseline_model_forward.1} parent=11 // pred_region
        _
      $region24: #{baseline_model_forward.1} parent=11 // pred_fallthru
        _
      // Predicated region
      $region25: #{baseline_model_forward.1} parent=11 // pred_check
        %p171 = pneg %p121
      $region26: #{baseline_model_forward.1} parent=11 // pred_check_branch
        %173 = sbr.rel (%p171) target = $region28
      $region27: #{baseline_model_forward.1} parent=11 // pred_region
        _
      $region28: #{baseline_model_forward.1} parent=11 // pred_fallthru
        _
    $region12: #{baseline_model_forward.1} parent=5 // pred_fallthru
      _
    %p174 = scmp.lt.s32.totalorder %s11, 3
    // Predicated region
    $region29: #{baseline_model_forward.1} parent=5 // pred_check
      %p175 = pneg %p174
    $region30: #{baseline_model_forward.1} parent=5 // pred_check_branch
      %177 = sbr.rel (%p175) target = $region32
    $region31: #{baseline_model_forward.1} parent=5 // pred_region
      // Predicated region
      $region33: #{baseline_model_forward.1} parent=31 // pred_check
        %p178 = pneg %p31
      $region34: #{baseline_model_forward.1} parent=31 // pred_check_branch
        %180 = sbr.rel (%p178) target = $region36
      $region35: #{baseline_model_forward.1} parent=31 // pred_region
        %s181 = smul.u32 2, %s11
        %p182 = scmp.lt.s32.totalorder %s181, 5
        %s183 = scalar_select %p182, %s181, 5
        %s184 = smul.addr %s183, 4
        %s185 = scalar_lea.vmem %s0, %s184
        %s186 = smul.u32 2, %s11
      $region36: #{baseline_model_forward.1} parent=31 // pred_fallthru
        _
    $region32: #{baseline_model_forward.1} parent=5 // pred_fallthru
      _
    %p187 = scmp.le.s32.totalorder 1, %s11
    %p188 = scmp.lt.s32.totalorder %s11, 4
    %p189 = pnand %p187, %p188
    %p190 = pneg %p189
    // Predicated region
    $region37: #{baseline_model_forward.1} parent=5 // pred_check
      _
    $region38: #{baseline_model_forward.1} parent=5 // pred_check_branch
      %192 = sbr.rel (%p189) target = $region40
    $region39: #{baseline_model_forward.1} parent=5 // pred_region
      %s193 = ssub.s32 %s11, 1
      %s194 = smul.u32 2, %s16
      %p195 = scmp.lt.s32.totalorder %s194, 5
      %s196 = scalar_select %p195, %s194, 5
      %s197 = smul.addr %s196, 4
      %s198 = scalar_lea.vmem %s0, %s197
      %p199 = pneg %p37
      %p200 = pneg %p34
      %p201 = pneg %p58
      %p202 = pneg %p55
      %p203 = pneg %p79
      %p204 = pneg %p76
      %p205 = pneg %p100
      %p206 = pneg %p97
      %p207 = pneg %p121
      %p208 = pneg %p118
      %p209 = pneg %p147
      %p210 = pneg %p144
      %s211 = smul.u32 2, %s16
      %p212 = scmp.lt.s32.totalorder %s211, 5
      %s213 = scalar_select %p212, %s211, 5
      %s214 = smul.addr %s213, 8
      %s215 = scalar_lea.vmem %s5, %s214
      %s216 = smul.u32 2, %s16
      %p217 = scmp.lt.s32.totalorder %s216, 5
      %s218 = scalar_select %p217, %s216, 5
      %s219 = smul.addr %s218, 4
      %s220 = scalar_lea.vmem %s0, %s219
      %s221 = smul.u32 2, %s16
      %s222 = smul.u32 2, %s16
      %p223 = scmp.lt.s32.totalorder %s222, 5
      %s224 = scalar_select %p223, %s222, 5
      %s225 = smul.addr %s224, 8
      %s226 = scalar_lea.vmem %s5, %s225
      %s227 = smul.u32 2, %s16
      %v229 = vld [vmem:[%s220] sm:$0xf]
      %v230 = vld [vmem:[%s220 + $0x4] sm:$0xf]
      %v231 = vld [vmem:[%s1] sm:$0xf]
      %v232 = vld [vmem:[%s1 + $0x4] sm:$0xf]
      %v233 = vld [vmem:[%s1 + $0x8] sm:$0xf]
      %v234 = vld [vmem:[%s1 + $0xc] sm:$0xf]
      %v235 = vld [vmem:[%s2] sm:$0x1]
      %v237 = vlaneseq
      %v238 = vshrl.u32 %v237, 7
      %v239 = vsub.s32 0, %v238
      %v240 = vrot.slane %v235, %v239
      %v244 = vunpack.c.l.b16 %v229
      %v245 = vunpack.c.l.b16 %v230
      %v246 = vpack.c.b16 %v245, %v244
      %v251 = vunpack.c.l.b16 %v231
      %v252 = vunpack.c.l.b16 %v232
      %v253 = vunpack.c.l.b16 %v233
      %v254 = vunpack.c.l.b16 %v234
      %v255 = vpack.c.b16 %v252, %v251
      %v256 = vpack.c.b16 %v254, %v253
      %vm259 = vcmask 261120
      %v261 = vsel %vm259, %v246, 0
      %263 = vmatprep.subr.bf16.mxu0 0
      %264 = vmatpush1.bf16.msra.mxu0 %v255
      %265 = vmatprep.subr.bf16.mxu0 0
      %266 = vmatpush1.bf16.msra.mxu0 %v256
      %267 = vmatprep.subr.bf16.mxu0 0
      %268 = vmatpush1.bf16.msra.mxu0 0
      %269 = vmatprep.subr.bf16.mxu0 0
      %270 = vmatpush1.bf16.msra.mxu0 0
      %271 = vmatprep.subr.bf16.mxu0 0
      %272 = vmatpush1.bf16.msra.mxu0 0
      %273 = vmatprep.subr.bf16.mxu0 0
      %274 = vmatpush1.bf16.msra.mxu0 0
      %275 = vmatprep.subr.bf16.mxu0 0
      %276 = vmatpush1.bf16.msra.mxu0 0
      %277 = vmatprep.subr.bf16.mxu0 0
      %278 = vmatpush1.bf16.msra.mxu0 0
      %279 = vmatprep.subr.bf16.mxu0 0
      %280 = vmatpush1.bf16.msra.mxu0 0
      %281 = vmatprep.subr.bf16.mxu0 0
      %282 = vmatpush1.bf16.msra.mxu0 0
      %283 = vmatprep.subr.bf16.mxu0 0
      %284 = vmatpush1.bf16.msra.mxu0 0
      %285 = vmatprep.subr.bf16.mxu0 0
      %286 = vmatpush1.bf16.msra.mxu0 0
      %287 = vmatprep.subr.bf16.mxu0 0
      %288 = vmatpush1.bf16.msra.mxu0 0
      %289 = vmatprep.subr.bf16.mxu0 0
      %290 = vmatpush1.bf16.msra.mxu0 0
      %291 = vmatprep.subr.bf16.mxu0 0
      %292 = vmatpush1.bf16.msra.mxu0 0
      %293 = vmatprep.subr.bf16.mxu0 0
      %294 = vmatpush1.bf16.msra.mxu0 0
      %295 = vmatprep.mubr.bf16.mxu0 0
      %296 = vmatmul.mubr.bf16.gmra.mrb[0].mxu0 %v261
      %v297 = vpop.f32.mrb[0].mxu0
      %v298 = vadd.f32 %v240, %v297
      %v299 = vpop.f32.mrb[0].mxu0
      %v300 = vpop.f32.mrb[0].mxu0
      %v301 = vadd.f32 %v240, %v300
      %v302 = vpop.f32.mrb[0].mxu0
      %303 = vdwg.mxu0
      %v304 = vtanh.pop %v298
      %v305 = vtanh.pop %v301
      %v306 = vpack.c.bf16 %v305, %v304
      %v307 = vld [vmem:[%s3] sm:$0xf]
      %v308 = vld [vmem:[%s3 + $0x4] sm:$0xf]
      %v309 = vld [vmem:[%s3 + $0x8] sm:$0xf]
      %v310 = vld [vmem:[%s3 + $0xc] sm:$0xf]
      %v311 = vld [vmem:[%s3 + $0x10] sm:$0xf]
      %v312 = vld [vmem:[%s3 + $0x14] sm:$0xf]
      %v313 = vld [vmem:[%s3 + $0x18] sm:$0xf]
      %v314 = vld [vmem:[%s3 + $0x1c] sm:$0xf]
      %v315 = vld [vmem:[%s3 + $0x20] sm:$0xf]
      %v316 = vld [vmem:[%s3 + $0x24] sm:$0xf]
      %v317 = vld [vmem:[%s3 + $0x28] sm:$0xf]
      %v318 = vld [vmem:[%s3 + $0x2c] sm:$0xf]
      %v319 = vld [vmem:[%s3 + $0x30] sm:$0xf]
      %v320 = vld [vmem:[%s3 + $0x34] sm:$0xf]
      %v321 = vld [vmem:[%s3 + $0x38] sm:$0xf]
      %v322 = vld [vmem:[%s3 + $0x3c] sm:$0xf]
      %v323 = vld [vmem:[%s4] sm:$0x1]
      %v325 = vlaneseq
      %v326 = vshrl.u32 %v325, 7
      %v327 = vsub.s32 0, %v326
      %v328 = vrot.slane %v323, %v327
      %v346 = vunpack.c.l.b16 %v307
      %v347 = vunpack.c.l.b16 %v308
      %v348 = vunpack.c.l.b16 %v309
      %v349 = vunpack.c.l.b16 %v310
      %v350 = vunpack.c.l.b16 %v311
      %v351 = vunpack.c.l.b16 %v312
      %v352 = vunpack.c.l.b16 %v313
      %v353 = vunpack.c.l.b16 %v314
      %v354 = vunpack.c.l.b16 %v315
      %v355 = vunpack.c.l.b16 %v316
      %v356 = vunpack.c.l.b16 %v317
      %v357 = vunpack.c.l.b16 %v318
      %v358 = vunpack.c.l.b16 %v319
      %v359 = vunpack.c.l.b16 %v320
      %v360 = vunpack.c.l.b16 %v321
      %v361 = vunpack.c.l.b16 %v322
      %v362 = vpack.c.b16 %v347, %v346
      %v363 = vpack.c.b16 %v349, %v348
      %v364 = vpack.c.b16 %v351, %v350
      %v365 = vpack.c.b16 %v353, %v352
      %v366 = vpack.c.b16 %v355, %v354
      %v367 = vpack.c.b16 %v357, %v356
      %v368 = vpack.c.b16 %v359, %v358
      %v369 = vpack.c.b16 %v361, %v360
      %378 = vmatprep.subr.bf16.mxu0 0
      %379 = vmatpush1.bf16.msra.mxu0 %v362
      %380 = vmatprep.subr.bf16.mxu0 0
      %381 = vmatpush1.bf16.msra.mxu0 %v363
      %382 = vmatprep.subr.bf16.mxu0 0
      %383 = vmatpush1.bf16.msra.mxu0 %v364
      %384 = vmatprep.subr.bf16.mxu0 0
      %385 = vmatpush1.bf16.msra.mxu0 %v365
      %386 = vmatprep.subr.bf16.mxu0 0
      %387 = vmatpush1.bf16.msra.mxu0 %v366
      %388 = vmatprep.subr.bf16.mxu0 0
      %389 = vmatpush1.bf16.msra.mxu0 %v367
      %390 = vmatprep.subr.bf16.mxu0 0
      %391 = vmatpush1.bf16.msra.mxu0 %v368
      %392 = vmatprep.subr.bf16.mxu0 0
      %393 = vmatpush1.bf16.msra.mxu0 %v369
      %394 = vmatprep.subr.bf16.mxu0 0
      %395 = vmatpush1.bf16.msra.mxu0 0
      %396 = vmatprep.subr.bf16.mxu0 0
      %397 = vmatpush1.bf16.msra.mxu0 0
      %398 = vmatprep.subr.bf16.mxu0 0
      %399 = vmatpush1.bf16.msra.mxu0 0
      %400 = vmatprep.subr.bf16.mxu0 0
      %401 = vmatpush1.bf16.msra.mxu0 0
      %402 = vmatprep.subr.bf16.mxu0 0
      %403 = vmatpush1.bf16.msra.mxu0 0
      %404 = vmatprep.subr.bf16.mxu0 0
      %405 = vmatpush1.bf16.msra.mxu0 0
      %406 = vmatprep.subr.bf16.mxu0 0
      %407 = vmatpush1.bf16.msra.mxu0 0
      %408 = vmatprep.subr.bf16.mxu0 0
      %409 = vmatpush1.bf16.msra.mxu0 0
      %410 = vmatprep.mubr.bf16.mxu0 0
      %411 = vmatmul.mubr.bf16.gmra.mrb[0].mxu0 %v306
      %v412 = vpop.f32.mrb[0].mxu0
      %v413 = vadd.f32 %v328, %v412
      %v414 = vpop.f32.mrb[0].mxu0
      %v415 = vpop.f32.mrb[0].mxu0
      %v416 = vadd.f32 %v328, %v415
      %v417 = vpop.f32.mrb[0].mxu0
      %418 = vdwg.mxu0
      %v419 = vtanh.pop %v413
      %v420 = vtanh.pop %v416
      %421 = vst [vmem:[%s226] sm:$0xff] %v419
      %422 = vst [vmem:[%s226 + $0x8] sm:$0xff] %v420
      %s423 = smul.u32 2, %s16
      %p424 = scmp.lt.s32.totalorder %s423, 5
      %s425 = scalar_select %p424, %s423, 5
      %s426 = smul.addr %s425, 8
      %s427 = scalar_lea.vmem %s5, %s426
      // Predicated region
      $region41: #{baseline_model_forward.1} parent=39 // pred_check
        %p428 = pneg %p144
      $region42: #{baseline_model_forward.1} parent=39 // pred_check_branch
        %430 = sbr.rel (%p428) target = $region44
      $region43: #{baseline_model_forward.1} parent=39 // pred_region
        %s431 = smul.u32 2, %s16
      $region44: #{baseline_model_forward.1} parent=39 // pred_fallthru
        _
    $region40: #{baseline_model_forward.1} parent=5 // pred_fallthru
      _
    %p432 = scmp.le.s32.totalorder 2, %s11
    // Predicated region
    $region45: #{baseline_model_forward.1} parent=5 // pred_check
      %p433 = pneg %p432
    $region46: #{baseline_model_forward.1} parent=5 // pred_check_branch
      %435 = sbr.rel (%p433) target = $region48
    $region47: #{baseline_model_forward.1} parent=5 // pred_region
      %s436 = ssub.s32 %s11, 2
      // Predicated region
      $region49: #{baseline_model_forward.1} parent=47 // pred_check
        %p437 = pneg %p150
      $region50: #{baseline_model_forward.1} parent=47 // pred_check_branch
        %439 = sbr.rel (%p437) target = $region52
      $region51: #{baseline_model_forward.1} parent=47 // pred_region
        %s440 = smul.u32 2, %s17
        %p441 = scmp.lt.s32.totalorder %s440, 5
        %s442 = scalar_select %p441, %s440, 5
        %s443 = smul.addr %s442, 8
        %s444 = scalar_lea.vmem %s5, %s443
      $region52: #{baseline_model_forward.1} parent=47 // pred_fallthru
        _
    $region48: #{baseline_model_forward.1} parent=5 // pred_fallthru
      _
  $region6: #{baseline_model_forward.1} parent=0 // loop_footer
    %s15 = sadd.s32 1, %s11
  $region7: #{baseline_model_forward.1} parent=0 // loop_footer_branch
    %10 = sbr.rel target = $region3
  $region8: #{baseline_model_forward.1} parent=0 // loop_exit
    _

</llo_original>
